<compile_context>
chip_gen: v7x
topology: tpu7x:2x2x1
jax: 0.10.0
libtpu: 0.0.40
codegen_flags: <defaults>
</compile_context>

<pallas_src>
import functools

import jax
import jax.numpy as jnp
from jax import lax
from jax.experimental import pallas as pl
from jax.experimental.pallas import tpu as pltpu

NEG_SLOPE = 0.1
BN_EPS = 1e-5


def _leaky(z):
    return jnp.where(z > 0, z, NEG_SLOPE * z)


def res_layer_kernel(x_ref, w1_ref, w3_ref, mask_ref, bias_ref, o_ref,
                     *, H, W, Cmid, C, pad1, NB):
    """NB images per grid step.

    x_ref   : (NB, C, H*W)  f32   NCHW images, spatial dims flattened (lane-dense)
    w1_ref  : (Cmid, C)     bf16  1x1 conv weight with BN1 scale folded in
    w3_ref  : (C, 9*Cmid)   bf16  3x3 conv weight, im2col (ky,kx,cin), BN2 folded
    mask_ref: (8, H*W)      f32   0/1 boundary masks for the 8 shifted taps
    bias_ref: (pad1+C, 1)   f32   rows [0,Cmid)=BN1 bias, rows [pad1,pad1+C)=BN2 bias
    o_ref   : (NB, C, H*W)
    """
    HW = H * W

    # Grid-invariant loads hoisted out of the per-image loop.
    w1 = w1_ref[...]                                   # (Cmid, C)     bf16
    w3 = w3_ref[...]                                   # (C, 9*Cmid)   bf16
    masks = mask_ref[...]                              # (8, HW)       f32
    b1 = bias_ref[0:Cmid, :]                           # (Cmid, 1)     f32
    b2 = bias_ref[pad1:pad1 + C, :]                    # (C, 1)        f32

    def body(i, carry):
        x = x_ref[i]                                   # (C, HW) f32

        # ---- layer1: 1x1 conv == channel matmul, + bias + LeakyReLU -------
        h = jnp.dot(w1, x.astype(jnp.bfloat16),
                    preferred_element_type=jnp.float32)
        h = _leaky(h + b1)                             # (Cmid, HW) f32

        # ---- layer2: 3x3 conv (pad=1) as ONE im2col matmul -----------------
        # Shifted taps = lane rolls (XLU slot) * precomputed boundary mask
        # (single vmul per tap); no padded scratch, no per-step mask rebuild.
        pieces = []
        m = 0
        for ky in range(3):
            for kx in range(3):
                dy, dx = ky - 1, kx - 1
                if dy == 0 and dx == 0:
                    pieces.append(h)
                    continue
                d = dy * W + dx
                rolled = pltpu.roll(h, (-d) % HW, 1)   # rolled[p] = h[p + d]
                pieces.append(rolled * masks[m:m + 1, :])
                m += 1
        # Cast to bf16 AFTER the concatenate (avoids sublane misalignment of
        # the individual Cmid-row pieces).
        col = jnp.concatenate(pieces, axis=0).astype(jnp.bfloat16)  # (9*Cmid, HW)

        acc = jnp.dot(w3, col, preferred_element_type=jnp.float32)
        out = _leaky(acc + b2)                         # (C, HW) f32

        # ---- residual add ---------------------------------------------------
        o_ref[i] = (x + out).astype(o_ref.dtype)
        return carry

    lax.fori_loop(0, NB, body, 0, unroll=True)


def _pick_imgs_per_step(N, per_img_bytes, *, target_step_bytes=512 * 1024,
                        min_steps=4):
    """Largest divisor of N that keeps >= min_steps grid steps (so Pallas
    double-buffering still overlaps on both TensorCores) while the per-step
    input tile stays under target_step_bytes."""
    nb = 1
    for cand in range(1, N + 1):
        if N % cand:
            continue
        if cand * per_img_bytes > target_step_bytes:
            break
        if cand == 1 or N // cand >= min_steps:
            nb = cand
    return nb


def res_layer(x_nchw, w1_bf16, w3_bf16, masks, bias, *, pad1):
    """x_nchw: (N, C, H, W) float32. Returns (N, C, H, W)."""
    N, C, H, W = x_nchw.shape
    Cmid = w1_bf16.shape[0]
    HW = H * W
    x2 = x_nchw.reshape(N, C, HW)

    NB = _pick_imgs_per_step(N, C * HW * 4)
    grid = (N // NB,)

    # Per-step VMEM footprint estimate (double-buffered I/O tiles + im2col
    # working set + invariant weights/masks); used to set an explicit scoped
    # VMEM limit so the same block choices compile on v5e / v6e / v7x.
    step_bytes = (
        4 * (2 * NB * C * HW               # x blocks (double-buffered)
             + 2 * NB * C * HW             # out blocks (double-buffered)
             + 8 * HW                      # boundary masks
             + (9 * Cmid + Cmid + C) * HW  # col + h + acc working set
             + (pad1 + C))                 # biases
        + 2 * (Cmid * C + C * 9 * Cmid))   # bf16 weights
    vmem_limit = int(min(48 * 1024 * 1024,
                         max(2 * step_bytes, 4 * 1024 * 1024)))

    flops = 2 * N * HW * (C * Cmid + 9 * Cmid * C)
    bytes_accessed = (4 * 2 * N * C * HW                  # x + out (f32)
                      + 2 * (Cmid * C + 9 * Cmid * C)     # bf16 weights
                      + 4 * (8 * HW + pad1 + C))          # masks + biases

    out = pl.pallas_call(
        functools.partial(res_layer_kernel, H=H, W=W, Cmid=Cmid, C=C,
                          pad1=pad1, NB=NB),
        out_shape=jax.ShapeDtypeStruct((N, C, HW), x_nchw.dtype),
        grid_spec=pltpu.PrefetchScalarGridSpec(
            num_scalar_prefetch=0,
            grid=grid,
            in_specs=[
                pl.BlockSpec((NB, C, HW), lambda n: (n, 0, 0)),
                pl.BlockSpec((Cmid, C), lambda n: (0, 0)),
                pl.BlockSpec((C, 9 * Cmid), lambda n: (0, 0)),
                pl.BlockSpec((8, HW), lambda n: (0, 0)),
                pl.BlockSpec((pad1 + C, 1), lambda n: (0, 0)),
            ],
            out_specs=pl.BlockSpec((NB, C, HW), lambda n: (n, 0, 0)),
        ),
        compiler_params=pltpu.CompilerParams(
            dimension_semantics=("parallel",),
            vmem_limit_bytes=vmem_limit),
        cost_estimate=pl.CostEstimate(
            flops=flops, transcendentals=0, bytes_accessed=bytes_accessed),
    )(x2, w1_bf16, w3_bf16, masks, bias)

    return out.reshape(N, C, H, W)


def _fold_bn(gamma, beta, rmean, rvar):
    scale = gamma / jnp.sqrt(rvar + BN_EPS)
    bias = beta - rmean * scale
    return scale, bias


def prepare_params(w1_oihw, w3_oihw, g1, bt1, m1, v1, g2, bt2, m2, v2, H, W):
    """Fold BN scales into conv weights (stored bf16), build the merged bias
    vector and the precomputed boundary masks."""
    Cmid, C = w1_oihw.shape[0], w1_oihw.shape[1]
    HW = H * W

    s1, b1 = _fold_bn(g1, bt1, m1, v1)
    s2, b2 = _fold_bn(g2, bt2, m2, v2)

    # 1x1: (O,I,1,1) -> (O,I); fold BN1 scale into each output row.
    w1 = (w1_oihw[:, :, 0, 0] * s1[:, None]).astype(jnp.bfloat16)
    # 3x3: (O,I,3,3) -> (O,ky,kx,I) -> (O,9I); fold BN2 scale into each row.
    w3 = (jnp.transpose(w3_oihw, (0, 2, 3, 1)).reshape(C, 9 * Cmid)
          * s2[:, None]).astype(jnp.bfloat16)

    # Single grid-invariant bias input: rows [0,Cmid)=BN1 bias,
    # rows [pad1,pad1+C)=BN2 bias (first segment padded to a sublane multiple).
    pad1 = ((Cmid + 7) // 8) * 8
    bias = jnp.zeros((pad1 + C, 1), jnp.float32)
    bias = bias.at[:Cmid, 0].set(b1).at[pad1:pad1 + C, 0].set(b2)

    # 0/1 boundary masks for the 8 shifted im2col taps, in (ky,kx) order
    # (skipping the center tap), matching the kernel loop.
    cols = jnp.arange(HW, dtype=jnp.int32) % W
    rows = jnp.arange(HW, dtype=jnp.int32) // W
    mask_rows = []
    for ky in range(3):
        for kx in range(3):
            dy, dx = ky - 1, kx - 1
            if dy == 0 and dx == 0:
                continue
            valid = ((cols + dx >= 0) & (cols + dx < W) &
                     (rows + dy >= 0) & (rows + dy < H))
            mask_rows.append(valid.astype(jnp.float32))
    masks = jnp.stack(mask_rows, axis=0)               # (8, HW)

    return w1, w3, masks, bias, pad1


def _ref_forward(x, w1_oihw, w3_oihw, g1, bt1, m1, v1, g2, bt2, m2, v2):
    """Pure-JAX f32 reference matching the PyTorch module in eval mode."""
    def bn(z, g, b, m, v):
        sh = (1, -1, 1, 1)
        return (z - m.reshape(sh)) / jnp.sqrt(v.reshape(sh) + BN_EPS) \
            * g.reshape(sh) + b.reshape(sh)

    dn = ('NCHW', 'OIHW', 'NCHW')
    h = lax.conv_general_dilated(x, w1_oihw, (1, 1), 'VALID',
                                 dimension_numbers=dn)
    h = _leaky(bn(h, g1, bt1, m1, v1))
    o = lax.conv_general_dilated(h, w3_oihw, (1, 1), ((1, 1), (1, 1)),
                                 dimension_numbers=dn)
    o = _leaky(bn(o, g2, bt2, m2, v2))
    return x + o


if __name__ == "__main__":
    key = jax.random.PRNGKey(0)
    ks = jax.random.split(key, 11)

    N, ni, H, W = 2, 16, 16, 16
    cmid = ni // 2

    x = jax.random.normal(ks[0], (N, ni, H, W), jnp.float32)

    # Conv weights in PyTorch OIHW layout (no bias, as in the module).
    w1_oihw = 0.2 * jax.random.normal(ks[1], (cmid, ni, 1, 1), jnp.float32)
    w3_oihw = 0.1 * jax.random.normal(ks[2], (ni, cmid, 3, 3), jnp.float32)

    # BatchNorm parameters + running stats (eval-mode semantics).
    g1 = 1.0 + 0.1 * jax.random.normal(ks[3], (cmid,), jnp.float32)
    bt1 = 0.1 * jax.random.normal(ks[4], (cmid,), jnp.float32)
    m1 = 0.1 * jax.random.normal(ks[5], (cmid,), jnp.float32)
    v1 = jax.random.uniform(ks[6], (cmid,), jnp.float32, 0.5, 1.5)

    g2 = 1.0 + 0.1 * jax.random.normal(ks[7], (ni,), jnp.float32)
    bt2 = 0.1 * jax.random.normal(ks[8], (ni,), jnp.float32)
    m2 = 0.1 * jax.random.normal(ks[9], (ni,), jnp.float32)
    v2 = jax.random.uniform(ks[10], (ni,), jnp.float32, 0.5, 1.5)

    w1, w3, masks, bias, pad1 = prepare_params(
        w1_oihw, w3_oihw, g1, bt1, m1, v1, g2, bt2, m2, v2, H, W)

    out = res_layer(x, w1, w3, masks, bias, pad1=pad1)
    out = jax.block_until_ready(out)

    ref = _ref_forward(x, w1_oihw, w3_oihw, g1, bt1, m1, v1, g2, bt2, m2, v2)
    ref = jax.block_until_ready(ref)

    assert out.shape == (N, ni, H, W)
    # Tolerances deliberately loosened for bf16 matmul operands (f32 accum).
    err = float(jnp.max(jnp.abs(out - ref)))
    assert jnp.allclose(out, ref, atol=3e-2, rtol=3e-2), err
    print("KERNEL_OK")
</pallas_src>

<mosaic_0001>
module attributes {stable_mosaic.version = 11 : i64} {
  func.func @res_layer_kernel(%arg0: i32, %arg1: memref<1x16x256xf32, #tpu.memory_space<vmem>>, %arg2: memref<8x16xbf16, #tpu.memory_space<vmem>>, %arg3: memref<16x72xbf16, #tpu.memory_space<vmem>>, %arg4: memref<8x256xf32, #tpu.memory_space<vmem>>, %arg5: memref<24x1xf32, #tpu.memory_space<vmem>>, %arg6: memref<1x16x256xf32, #tpu.memory_space<vmem>>) attributes {dimension_semantics = [#tpu.dimension_semantics<parallel>], iteration_bounds = array<i64: 2>, scalar_prefetch = 0 : i64, scratch_operands = 0 : i64, tpu.core_type = #tpu.core_type<tc>, window_params = [{transform_indices = @transform_0, window_bounds = array<i64: 1, 16, 256>}, {pipeline_mode = #tpu.pipeline_mode<synchronous>, transform_indices = @transform_1, window_bounds = array<i64: 8, 16>}, {pipeline_mode = #tpu.pipeline_mode<synchronous>, transform_indices = @transform_2, window_bounds = array<i64: 16, 72>}, {pipeline_mode = #tpu.pipeline_mode<synchronous>, transform_indices = @transform_3, window_bounds = array<i64: 8, 256>}, {pipeline_mode = #tpu.pipeline_mode<synchronous>, transform_indices = @transform_4, window_bounds = array<i64: 24, 1>}, {transform_indices = @transform_5, window_bounds = array<i64: 1, 16, 256>}]} {
    %c0 = arith.constant 0 : index
    %c0_0 = arith.constant 0 : index
    %0 = vector.load %arg2[%c0, %c0_0] : memref<8x16xbf16, #tpu.memory_space<vmem>>, vector<8x16xbf16>
    %c0_1 = arith.constant 0 : index
    %c0_2 = arith.constant 0 : index
    %1 = vector.load %arg3[%c0_1, %c0_2] : memref<16x72xbf16, #tpu.memory_space<vmem>>, vector<16x72xbf16>
    %c0_3 = arith.constant 0 : index
    %c0_4 = arith.constant 0 : index
    %2 = vector.load %arg4[%c0_3, %c0_4] : memref<8x256xf32, #tpu.memory_space<vmem>>, vector<8x256xf32>
    %c0_5 = arith.constant 0 : index
    %c0_6 = arith.constant 0 : index
    %3 = vector.load %arg5[%c0_5, %c0_6] : memref<24x1xf32, #tpu.memory_space<vmem>>, vector<8x1xf32>
    %c8 = arith.constant 8 : index
    %c0_7 = arith.constant 0 : index
    %4 = vector.load %arg5[%c8, %c0_7] : memref<24x1xf32, #tpu.memory_space<vmem>>, vector<16x1xf32>
    %c0_i32 = arith.constant 0 : i32
    %5 = arith.index_cast %c0_i32 : i32 to index
    %c0_8 = arith.constant 0 : index
    %c0_9 = arith.constant 0 : index
    %6 = vector.load %arg1[%5, %c0_8, %c0_9] : memref<1x16x256xf32, #tpu.memory_space<vmem>>, vector<1x16x256xf32>
    %7 = vector.shape_cast %6 : vector<1x16x256xf32> to vector<16x256xf32>
    %8 = arith.truncf %7 : vector<16x256xf32> to vector<16x256xbf16>
    %cst = arith.constant dense<0.000000e+00> : vector<8x256xf32>
    %9 = tpu.matmul %0, %8, %cst {dimension_numbers = #tpu.dot_dimension_numbers<[1], [0], [0], [1], [0, 0, 1, 1], [], []>} : vector<8x16xbf16>, vector<16x256xbf16>, vector<8x256xf32> -> vector<8x256xf32>
    %10 = vector.broadcast %3 : vector<8x1xf32> to vector<8x256xf32>
    %11 = arith.addf %9, %10 : vector<8x256xf32>
    %cst_10 = arith.constant 0.000000e+00 : f32
    %12 = vector.broadcast %cst_10 : f32 to vector<8x256xf32>
    %13 = arith.cmpf ogt, %11, %12 : vector<8x256xf32>
    %cst_11 = arith.constant 1.000000e-01 : f32
    %14 = vector.broadcast %cst_11 : f32 to vector<8x256xf32>
    %15 = arith.mulf %14, %11 : vector<8x256xf32>
    %16 = arith.select %13, %11, %15 : vector<8x256xi1>, vector<8x256xf32>
    %c17_i32 = arith.constant 17 : i32
    %17 = tpu.dynamic_rotate %16 by %c17_i32 dim 1 : vector<8x256xf32>, i32 -> vector<8x256xf32>
    %18 = vector.extract_strided_slice %2 {offsets = [0, 0], sizes = [1, 256], strides = [1, 1]} : vector<8x256xf32> to vector<1x256xf32>
    %19 = vector.broadcast %18 : vector<1x256xf32> to vector<8x256xf32>
    %20 = arith.mulf %17, %19 : vector<8x256xf32>
    %c16_i32 = arith.constant 16 : i32
    %21 = tpu.dynamic_rotate %16 by %c16_i32 dim 1 : vector<8x256xf32>, i32 -> vector<8x256xf32>
    %22 = vector.extract_strided_slice %2 {offsets = [1, 0], sizes = [1, 256], strides = [1, 1]} : vector<8x256xf32> to vector<1x256xf32>
    %23 = vector.broadcast %22 : vector<1x256xf32> to vector<8x256xf32>
    %24 = arith.mulf %21, %23 : vector<8x256xf32>
    %c15_i32 = arith.constant 15 : i32
    %25 = tpu.dynamic_rotate %16 by %c15_i32 dim 1 : vector<8x256xf32>, i32 -> vector<8x256xf32>
    %26 = vector.extract_strided_slice %2 {offsets = [2, 0], sizes = [1, 256], strides = [1, 1]} : vector<8x256xf32> to vector<1x256xf32>
    %27 = vector.broadcast %26 : vector<1x256xf32> to vector<8x256xf32>
    %28 = arith.mulf %25, %27 : vector<8x256xf32>
    %c1_i32 = arith.constant 1 : i32
    %29 = tpu.dynamic_rotate %16 by %c1_i32 dim 1 : vector<8x256xf32>, i32 -> vector<8x256xf32>
    %30 = vector.extract_strided_slice %2 {offsets = [3, 0], sizes = [1, 256], strides = [1, 1]} : vector<8x256xf32> to vector<1x256xf32>
    %31 = vector.broadcast %30 : vector<1x256xf32> to vector<8x256xf32>
    %32 = arith.mulf %29, %31 : vector<8x256xf32>
    %c255_i32 = arith.constant 255 : i32
    %33 = tpu.dynamic_rotate %16 by %c255_i32 dim 1 : vector<8x256xf32>, i32 -> vector<8x256xf32>
    %34 = vector.extract_strided_slice %2 {offsets = [4, 0], sizes = [1, 256], strides = [1, 1]} : vector<8x256xf32> to vector<1x256xf32>
    %35 = vector.broadcast %34 : vector<1x256xf32> to vector<8x256xf32>
    %36 = arith.mulf %33, %35 : vector<8x256xf32>
    %c241_i32 = arith.constant 241 : i32
    %37 = tpu.dynamic_rotate %16 by %c241_i32 dim 1 : vector<8x256xf32>, i32 -> vector<8x256xf32>
    %38 = vector.extract_strided_slice %2 {offsets = [5, 0], sizes = [1, 256], strides = [1, 1]} : vector<8x256xf32> to vector<1x256xf32>
    %39 = vector.broadcast %38 : vector<1x256xf32> to vector<8x256xf32>
    %40 = arith.mulf %37, %39 : vector<8x256xf32>
    %c240_i32 = arith.constant 240 : i32
    %41 = tpu.dynamic_rotate %16 by %c240_i32 dim 1 : vector<8x256xf32>, i32 -> vector<8x256xf32>
    %42 = vector.extract_strided_slice %2 {offsets = [6, 0], sizes = [1, 256], strides = [1, 1]} : vector<8x256xf32> to vector<1x256xf32>
    %43 = vector.broadcast %42 : vector<1x256xf32> to vector<8x256xf32>
    %44 = arith.mulf %41, %43 : vector<8x256xf32>
    %c239_i32 = arith.constant 239 : i32
    %45 = tpu.dynamic_rotate %16 by %c239_i32 dim 1 : vector<8x256xf32>, i32 -> vector<8x256xf32>
    %46 = vector.extract_strided_slice %2 {offsets = [7, 0], sizes = [1, 256], strides = [1, 1]} : vector<8x256xf32> to vector<1x256xf32>
    %47 = vector.broadcast %46 : vector<1x256xf32> to vector<8x256xf32>
    %48 = arith.mulf %45, %47 : vector<8x256xf32>
    %49 = tpu.concatenate %20, %24, %28, %32, %16, %36, %40, %44, %48 in 0 : vector<8x256xf32>, vector<8x256xf32>, vector<8x256xf32>, vector<8x256xf32>, vector<8x256xf32>, vector<8x256xf32>, vector<8x256xf32>, vector<8x256xf32>, vector<8x256xf32> -> vector<72x256xf32>
    %50 = arith.truncf %49 : vector<72x256xf32> to vector<72x256xbf16>
    %cst_12 = arith.constant dense<0.000000e+00> : vector<16x256xf32>
    %51 = tpu.matmul %1, %50, %cst_12 {dimension_numbers = #tpu.dot_dimension_numbers<[1], [0], [0], [1], [0, 0, 1, 1], [], []>} : vector<16x72xbf16>, vector<72x256xbf16>, vector<16x256xf32> -> vector<16x256xf32>
    %52 = vector.broadcast %4 : vector<16x1xf32> to vector<16x256xf32>
    %53 = arith.addf %51, %52 : vector<16x256xf32>
    %cst_13 = arith.constant 0.000000e+00 : f32
    %54 = vector.broadcast %cst_13 : f32 to vector<16x256xf32>
    %55 = arith.cmpf ogt, %53, %54 : vector<16x256xf32>
    %cst_14 = arith.constant 1.000000e-01 : f32
    %56 = vector.broadcast %cst_14 : f32 to vector<16x256xf32>
    %57 = arith.mulf %56, %53 : vector<16x256xf32>
    %58 = arith.select %55, %53, %57 : vector<16x256xi1>, vector<16x256xf32>
    %59 = arith.addf %7, %58 : vector<16x256xf32>
    %60 = arith.index_cast %c0_i32 : i32 to index
    %c0_15 = arith.constant 0 : index
    %c0_16 = arith.constant 0 : index
    %61 = vector.load %arg6[%60, %c0_15, %c0_16] : memref<1x16x256xf32, #tpu.memory_space<vmem>>, vector<1x16x256xf32>
    %62 = vector.shape_cast %61 : vector<1x16x256xf32> to vector<16x256xf32>
    %63 = vector.shape_cast %59 : vector<16x256xf32> to vector<1x16x256xf32>
    tpu.vector_store %arg6[%60, %c0_15, %c0_16], %63 {strides = array<i32>} : memref<1x16x256xf32, #tpu.memory_space<vmem>>, vector<1x16x256xf32>,
    %c1_i32_17 = arith.constant 1 : i32
    return
  }
  func.func @transform_0(%arg0: i32) -> (i32, i32, i32) {
    %c0_i32 = arith.constant 0 : i32
    %c0_i32_0 = arith.constant 0 : i32
    %c0_i32_1 = arith.constant 0 : i32
    return %arg0, %c0_i32, %c0_i32_0 : i32, i32, i32
  }
  func.func @transform_1(%arg0: i32) -> (i32, i32) {
    %c0_i32 = arith.constant 0 : i32
    %c0_i32_0 = arith.constant 0 : i32
    %c0_i32_1 = arith.constant 0 : i32
    return %c0_i32, %c0_i32_0 : i32, i32
  }
  func.func @transform_2(%arg0: i32) -> (i32, i32) {
    %c0_i32 = arith.constant 0 : i32
    %c0_i32_0 = arith.constant 0 : i32
    %c0_i32_1 = arith.constant 0 : i32
    return %c0_i32, %c0_i32_0 : i32, i32
  }
  func.func @transform_3(%arg0: i32) -> (i32, i32) {
    %c0_i32 = arith.constant 0 : i32
    %c0_i32_0 = arith.constant 0 : i32
    %c0_i32_1 = arith.constant 0 : i32
    return %c0_i32, %c0_i32_0 : i32, i32
  }
  func.func @transform_4(%arg0: i32) -> (i32, i32) {
    %c0_i32 = arith.constant 0 : i32
    %c0_i32_0 = arith.constant 0 : i32
    %c0_i32_1 = arith.constant 0 : i32
    return %c0_i32, %c0_i32_0 : i32, i32
  }
  func.func @transform_5(%arg0: i32) -> (i32, i32, i32) {
    %c0_i32 = arith.constant 0 : i32
    %c0_i32_0 = arith.constant 0 : i32
    %c0_i32_1 = arith.constant 0 : i32
    return %arg0, %c0_i32, %c0_i32_0 : i32, i32, i32
  }
}

</mosaic_0001>

<llo_original>
// kernel: tpu_custom_call.1
$region0: #{tpu_custom_call.1}
  #allocation0 [shape = 'u32[]', space=smem, size = 0x4, offset = 0x4, fixed_abs, tag = 'smem constant byte address 0x4 - core index']
  #allocation1 [shape = 'u32[144,128]{1,0:T(1,128)}', space=vmem, size = 0x12000, scoped, tag = 'internal scratch']
  %s0 = inlined_call_operand.hbm [shape: f32[2,16,256], index: 0, kind: input, shape index: {}]
  %s1 = inlined_call_operand.vmem [shape: bf16[8,16], index: 1, kind: input, shape index: {}]
  %s2 = inlined_call_operand.vmem [shape: bf16[16,72], index: 2, kind: input, shape index: {}]
  %s3 = inlined_call_operand.vmem [shape: f32[8,256], index: 3, kind: input, shape index: {}]
  %s4 = inlined_call_operand.vmem [shape: f32[24,1], index: 4, kind: input, shape index: {}]
  %s5 = inlined_call_operand.hbm [shape: f32[2,16,256], index: 5, kind: output, shape index: {}]
  %s6 = sld [smem:[#allocation0]]
  $region57: #{tpu_custom_call.1} parent=0
    _
  %s8 = ssub.s32 1, %s6
  %s9 = scalar_select 0, %s8, %s6
  $region1: #{tpu_custom_call.1} parent=0
    #allocation2 [shape = 'u8[32768]{0}', space=vmem, size = 0x8000, scoped, tag = 'input window, operand 0']
    #allocation3 [shape = 's32[2]{0}', space=sflag, size = 0x8, scoped, tag = 'scoped memory for tpu_custom_call.1']
    #allocation4 [shape = 's32[2]{0}', space=sflag, size = 0x8, scoped, tag = 'scoped memory for tpu_custom_call.1']
    #allocation5 [shape = 'u8[32768]{0}', space=vmem, size = 0x8000, scoped, tag = 'output window, operand 0']
    %10 = vsyncpa [#allocation3], 0
    %s11 = scalar_lea.sflag [#allocation3], 1
    %12 = vsyncpa %s11, 0
    %13 = vsyncpa [#allocation4], 0
    %s14 = scalar_lea.sflag [#allocation4], 1
    %15 = vsyncpa %s14, 0
    loop: start=0, step=1, limit=4
    $region2: #{tpu_custom_call.1} parent=1 // loop_pre_header
      _
    $region3: #{tpu_custom_call.1} parent=1 // loop_header
      %s17 = sphi 0, %s21
      %p18 = scmp.ge.s32.totalorder %s17, 4
      %s27 = sphi 0, %s29
      %s30 = sphi 0, %s27
      %s31 = sphi 0, %s30
      %s47 = sphi 0, %s31
      %s51 = sphi 0, %s51
      %s53 = sphi 0, %s51
      %s54 = sphi 0, %s53
      %s68 = sphi 0, %s54
      %s72 = sphi 0, %s72
      %s74 = sphi 0, %s72
      %s75 = sphi 0, %s74
      %s89 = sphi 0, %s75
      %s93 = sphi 0, %s93
      %s95 = sphi 0, %s93
      %s96 = sphi 0, %s95
      %s110 = sphi 0, %s96
      %s114 = sphi 0, %s114
      %s116 = sphi 0, %s114
      %s117 = sphi 0, %s116
      %s131 = sphi 0, %s117
      %s137 = sphi 0, %s139
      %s140 = sphi 0, %s137
      %s141 = sphi 0, %s140
      %s157 = sphi 0, %s141
    $region4: #{tpu_custom_call.1} parent=1 // loop_header_branch
      %20 = sbr.rel (%p18) target = $region8
    $region5: #{tpu_custom_call.1} parent=1 // loop_body
      %s22 = ssub.s32 %s17, 1
      %s23 = ssub.s32 %s17, 2
      %s24 = sadd.s32 %s17, 1
      %s25 = ssub.s32 %s17, %s24
      %p26 = scmp.eq.s32.totalorder %s25, 0
      %s28 = sadd.s32 %s27, 1
      %s29 = scalar_select %p26, %s27, %s28
      %p32 = pneg %p26
      %p33 = scmp.eq.s32.totalorder %s17, 1
      %p34 = por %p32, %p33
      %p35 = scmp.ne.s32.totalorder %s27, %s30
      %p36 = scmp.eq.s32.totalorder %s17, 0
      %p37 = por %p35, %p36
      %p38 = scmp.ne.s32.totalorder %s27, %s30
      %p39 = scmp.eq.s32.totalorder %s22, 1
      %p40 = por %p38, %p39
      %p41 = scmp.ne.s32.totalorder %s30, %s31
      %p42 = scmp.eq.s32.totalorder %s22, 0
      %p43 = por %p41, %p42
      %p44 = scmp.ne.s32.totalorder %s30, %s31
      %p45 = scmp.eq.s32.totalorder %s23, 1
      %p46 = por %p44, %p45
      %p48 = scmp.ne.s32.totalorder %s31, %s47
      %p49 = scmp.eq.s32.totalorder %s23, 0
      %p50 = por %p48, %p49
      %s52 = sadd.s32 %s51, 1
      %p55 = scmp.eq.s32.totalorder %s17, 1
      %p56 = scmp.ne.s32.totalorder %s51, %s53
      %p57 = scmp.eq.s32.totalorder %s17, 0
      %p58 = por %p56, %p57
      %p59 = scmp.ne.s32.totalorder %s51, %s53
      %p60 = scmp.eq.s32.totalorder %s22, 1
      %p61 = por %p59, %p60
      %p62 = scmp.ne.s32.totalorder %s53, %s54
      %p63 = scmp.eq.s32.totalorder %s22, 0
      %p64 = por %p62, %p63
      %p65 = scmp.ne.s32.totalorder %s53, %s54
      %p66 = scmp.eq.s32.totalorder %s23, 1
      %p67 = por %p65, %p66
      %p69 = scmp.ne.s32.totalorder %s54, %s68
      %p70 = scmp.eq.s32.totalorder %s23, 0
      %p71 = por %p69, %p70
      %s73 = sadd.s32 %s72, 1
      %p76 = scmp.eq.s32.totalorder %s17, 1
      %p77 = scmp.ne.s32.totalorder %s72, %s74
      %p78 = scmp.eq.s32.totalorder %s17, 0
      %p79 = por %p77, %p78
      %p80 = scmp.ne.s32.totalorder %s72, %s74
      %p81 = scmp.eq.s32.totalorder %s22, 1
      %p82 = por %p80, %p81
      %p83 = scmp.ne.s32.totalorder %s74, %s75
      %p84 = scmp.eq.s32.totalorder %s22, 0
      %p85 = por %p83, %p84
      %p86 = scmp.ne.s32.totalorder %s74, %s75
      %p87 = scmp.eq.s32.totalorder %s23, 1
      %p88 = por %p86, %p87
      %p90 = scmp.ne.s32.totalorder %s75, %s89
      %p91 = scmp.eq.s32.totalorder %s23, 0
      %p92 = por %p90, %p91
      %s94 = sadd.s32 %s93, 1
      %p97 = scmp.eq.s32.totalorder %s17, 1
      %p98 = scmp.ne.s32.totalorder %s93, %s95
      %p99 = scmp.eq.s32.totalorder %s17, 0
      %p100 = por %p98, %p99
      %p101 = scmp.ne.s32.totalorder %s93, %s95
      %p102 = scmp.eq.s32.totalorder %s22, 1
      %p103 = por %p101, %p102
      %p104 = scmp.ne.s32.totalorder %s95, %s96
      %p105 = scmp.eq.s32.totalorder %s22, 0
      %p106 = por %p104, %p105
      %p107 = scmp.ne.s32.totalorder %s95, %s96
      %p108 = scmp.eq.s32.totalorder %s23, 1
      %p109 = por %p107, %p108
      %p111 = scmp.ne.s32.totalorder %s96, %s110
      %p112 = scmp.eq.s32.totalorder %s23, 0
      %p113 = por %p111, %p112
      %s115 = sadd.s32 %s114, 1
      %p118 = scmp.eq.s32.totalorder %s17, 1
      %p119 = scmp.ne.s32.totalorder %s114, %s116
      %p120 = scmp.eq.s32.totalorder %s17, 0
      %p121 = por %p119, %p120
      %p122 = scmp.ne.s32.totalorder %s114, %s116
      %p123 = scmp.eq.s32.totalorder %s22, 1
      %p124 = por %p122, %p123
      %p125 = scmp.ne.s32.totalorder %s116, %s117
      %p126 = scmp.eq.s32.totalorder %s22, 0
      %p127 = por %p125, %p126
      %p128 = scmp.ne.s32.totalorder %s116, %s117
      %p129 = scmp.eq.s32.totalorder %s23, 1
      %p130 = por %p128, %p129
      %p132 = scmp.ne.s32.totalorder %s117, %s131
      %p133 = scmp.eq.s32.totalorder %s23, 0
      %p134 = por %p132, %p133
      %s135 = ssub.s32 %s17, %s24
      %p136 = scmp.eq.s32.totalorder %s135, 0
      %s138 = sadd.s32 %s137, 1
      %s139 = scalar_select %p136, %s137, %s138
      %p142 = pneg %p136
      %p143 = scmp.eq.s32.totalorder %s17, 1
      %p144 = por %p142, %p143
      %p145 = scmp.ne.s32.totalorder %s137, %s140
      %p146 = scmp.eq.s32.totalorder %s17, 0
      %p147 = por %p145, %p146
      %p148 = scmp.ne.s32.totalorder %s137, %s140
      %p149 = scmp.eq.s32.totalorder %s22, 1
      %p150 = por %p148, %p149
      %p151 = scmp.ne.s32.totalorder %s140, %s141
      %p152 = scmp.eq.s32.totalorder %s22, 0
      %p153 = por %p151, %p152
      %p154 = scmp.ne.s32.totalorder %s140, %s141
      %p155 = scmp.eq.s32.totalorder %s23, 1
      %p156 = por %p154, %p155
      %p158 = scmp.ne.s32.totalorder %s141, %s157
      %p159 = scmp.eq.s32.totalorder %s23, 0
      %p160 = por %p158, %p159
      %p161 = scmp.le.s32.totalorder 1, %s17
      %p162 = scmp.lt.s32.totalorder %s17, 3
      %p163 = pnand %p161, %p162
      %p164 = pneg %p163
      // Predicated region
      $region9: #{tpu_custom_call.1} parent=5 // pred_check
        _
      $region10: #{tpu_custom_call.1} parent=5 // pred_check_branch
        %166 = sbr.rel (%p163) target = $region12
      $region11: #{tpu_custom_call.1} parent=5 // pred_region
        %s167 = ssub.s32 %s17, 1
        // Predicated region
        $region13: #{tpu_custom_call.1} parent=11 // pred_check
          %p168 = pneg %p64
        $region14: #{tpu_custom_call.1} parent=11 // pred_check_branch
          %170 = sbr.rel (%p168) target = $region16
        $region15: #{tpu_custom_call.1} parent=11 // pred_region
          _
        $region16: #{tpu_custom_call.1} parent=11 // pred_fallthru
          _
        // Predicated region
        $region17: #{tpu_custom_call.1} parent=11 // pred_check
          %p171 = pneg %p85
        $region18: #{tpu_custom_call.1} parent=11 // pred_check_branch
          %173 = sbr.rel (%p171) target = $region20
        $region19: #{tpu_custom_call.1} parent=11 // pred_region
          _
        $region20: #{tpu_custom_call.1} parent=11 // pred_fallthru
          _
        // Predicated region
        $region21: #{tpu_custom_call.1} parent=11 // pred_check
          %p174 = pneg %p106
        $region22: #{tpu_custom_call.1} parent=11 // pred_check_branch
          %176 = sbr.rel (%p174) target = $region24
        $region23: #{tpu_custom_call.1} parent=11 // pred_region
          _
        $region24: #{tpu_custom_call.1} parent=11 // pred_fallthru
          _
        // Predicated region
        $region25: #{tpu_custom_call.1} parent=11 // pred_check
          %p177 = pneg %p127
        $region26: #{tpu_custom_call.1} parent=11 // pred_check_branch
          %179 = sbr.rel (%p177) target = $region28
        $region27: #{tpu_custom_call.1} parent=11 // pred_region
          _
        $region28: #{tpu_custom_call.1} parent=11 // pred_fallthru
          _
      $region12: #{tpu_custom_call.1} parent=5 // pred_fallthru
        _
      %p180 = scmp.lt.s32.totalorder %s17, 2
      // Predicated region
      $region29: #{tpu_custom_call.1} parent=5 // pred_check
        %p181 = pneg %p180
      $region30: #{tpu_custom_call.1} parent=5 // pred_check_branch
        %183 = sbr.rel (%p181) target = $region32
      $region31: #{tpu_custom_call.1} parent=5 // pred_region
        // Predicated region
        $region33: #{tpu_custom_call.1} parent=31 // pred_check
          %p184 = pneg %p37
        $region34: #{tpu_custom_call.1} parent=31 // pred_check_branch
          %186 = sbr.rel (%p184) target = $region36
        $region35: #{tpu_custom_call.1} parent=31 // pred_region
          %s187 = sand.u32 %s27, 1
          %s188 = scalar_lea.sflag [#allocation3], %s187
          %s189 = sand.u32 %s27, 1
          %s190 = smul.addr %s189, 32
          %s191 = scalar_lea.vmem [#allocation2], %s190
          %s193 = ssub.s32 512, 512
          %194 = vsyncadd %s188, %s193
          %s195 = smul.addr %s17, 4
          %s196 = smul.addr %s195, 128
          %s197 = scalar_lea.hbm %s0, %s196
          %s198 = sshll.u32 %s191, 4
          %s199 = int_to_ptr.vmem [resolvable:$true] %s198
          %204 = dma.hbm_to_vmem [thread:$0]  %s197, 512, %s199, %s188, 256, 256, 16
        $region36: #{tpu_custom_call.1} parent=31 // pred_fallthru
          _
      $region32: #{tpu_custom_call.1} parent=5 // pred_fallthru
        _
      %p205 = scmp.le.s32.totalorder 1, %s17
      %p206 = scmp.lt.s32.totalorder %s17, 3
      %p207 = pnand %p205, %p206
      %p208 = pneg %p207
      // Predicated region
      $region37: #{tpu_custom_call.1} parent=5 // pred_check
        _
      $region38: #{tpu_custom_call.1} parent=5 // pred_check_branch
        %210 = sbr.rel (%p207) target = $region40
      $region39: #{tpu_custom_call.1} parent=5 // pred_region
        %s211 = ssub.s32 %s17, 1
        %s212 = sand.u32 %s30, 1
        %s213 = scalar_lea.sflag [#allocation3], %s212
        %s214 = sand.u32 %s30, 1
        %s215 = smul.addr %s214, 32
        %s216 = scalar_lea.vmem [#allocation2], %s215
        // Predicated region
        $region41: #{tpu_custom_call.1} parent=39 // pred_check
          %p217 = pneg %p43
        $region42: #{tpu_custom_call.1} parent=39 // pred_check_branch
          %219 = sbr.rel (%p217) target = $region44
        $region43: #{tpu_custom_call.1} parent=39 // pred_region
          %220 = dma.done %s213, 512
        $region44: #{tpu_custom_call.1} parent=39 // pred_fallthru
          _
        %s221 = sand.u32 %s30, 1
        %s222 = scalar_lea.sflag [#allocation3], %s221
        %s223 = sand.u32 %s30, 1
        %s224 = smul.addr %s223, 32
        %s225 = scalar_lea.vmem [#allocation2], %s224
        %p226 = pneg %p43
        %p227 = pneg %p40
        %p228 = pneg %p64
        %p229 = pneg %p61
        %p230 = pneg %p85
        %p231 = pneg %p82
        %p232 = pneg %p106
        %p233 = pneg %p103
        %p234 = pneg %p127
        %p235 = pneg %p124
        %p236 = pneg %p153
        %p237 = pneg %p150
        %s238 = sand.u32 %s140, 1
        %s239 = scalar_lea.sflag [#allocation4], %s238
        %s240 = sand.u32 %s140, 1
        %s241 = smul.addr %s240, 32
        %s242 = scalar_lea.vmem [#allocation5], %s241
        %v244 = vld [vmem:[%s1] sm:$0xf]
        %v245 = vld [vmem:[%s2] sm:$0xf]
        %v246 = vld [vmem:[%s2 + $0x4] sm:$0xf]
        %v247 = vld [vmem:[%s3] sm:$0xff]
        %v248 = vld [vmem:[%s3 + $0x8] sm:$0xff]
        %v249 = vld [vmem:[%s4] sm:$0xff]
        %v250 = vld [vmem:[%s4 + $0x8] sm:$0xff]
        %v251 = vld [vmem:[%s4 + $0x10] sm:$0xff]
        %v252 = vld [vmem:[%s216] sm:$0xff]
        %v253 = vld [vmem:[%s216 + $0x8] sm:$0xff]
        %v254 = vld [vmem:[%s216 + $0x10] sm:$0xff]
        %v255 = vld [vmem:[%s216 + $0x18] sm:$0xff]
        %v256 = vpack.c.bf16 %v254, %v252
        %v257 = vpack.c.bf16 %v255, %v253
        %259 = vset.pattern.permute.xlu0 0
        %260 = vperm.xlu0 %259, %v249
        %v261 = vpop.permute.xlu0 %260
        %vm263 = vcmask 130048
        %v265 = vsel %vm263, %v244, 0
        %267 = vmatprep.subr.bf16.mxu0 %v257
        %268 = vmatpush1.bf16.msra.mxu0 %v256
        %269 = vmatprep.subr.bf16.mxu0 0
        %270 = vmatpush1.bf16.msra.mxu0 0
        %271 = vmatprep.subr.bf16.mxu0 0
        %272 = vmatpush1.bf16.msra.mxu0 0
        %273 = vmatprep.subr.bf16.mxu0 0
        %274 = vmatpush1.bf16.msra.mxu0 0
        %275 = vmatprep.subr.bf16.mxu0 0
        %276 = vmatpush1.bf16.msra.mxu0 0
        %277 = vmatprep.subr.bf16.mxu0 0
        %278 = vmatpush1.bf16.msra.mxu0 0
        %279 = vmatprep.subr.bf16.mxu0 0
        %280 = vmatpush1.bf16.msra.mxu0 0
        %281 = vmatprep.subr.bf16.mxu0 0
        %282 = vmatpush1.bf16.msra.mxu0 0
        %283 = vmatprep.subr.bf16.mxu0 0
        %284 = vmatpush1.bf16.msra.mxu0 0
        %285 = vmatprep.subr.bf16.mxu0 0
        %286 = vmatpush1.bf16.msra.mxu0 0
        %287 = vmatprep.subr.bf16.mxu0 0
        %288 = vmatpush1.bf16.msra.mxu0 0
        %289 = vmatprep.subr.bf16.mxu0 0
        %290 = vmatpush1.bf16.msra.mxu0 0
        %291 = vmatprep.subr.bf16.mxu0 0
        %292 = vmatpush1.bf16.msra.mxu0 0
        %293 = vmatprep.subr.bf16.mxu0 0
        %294 = vmatpush1.bf16.msra.mxu0 0
        %295 = vmatprep.subr.bf16.mxu0 0
        %296 = vmatpush1.bf16.msra.mxu0 0
        %297 = vmatprep.subr.bf16.mxu0 0
        %298 = vmatpush1.bf16.msra.mxu0 0
        %299 = vmatprep.mubr.bf16.mxu0 0
        %300 = vmatmul.mubr.bf16.gmra.mrb[0].mxu0 %v265
        %v301 = vpop.f32.mrb[0].mxu0
        %v302 = vadd.f32 %v261, %v301
        %v303 = vpop.f32.mrb[0].mxu0
        %v304 = vadd.f32 %v261, %v303
        %v305 = vpop.f32.mrb[0].mxu0
        %v306 = vpop.f32.mrb[0].mxu0
        %307 = vdwg.mxu0
        %vm308 = vcmp.gt.f32.partialorder %v302, 0.0
        %vm309 = vcmp.gt.f32.partialorder %v304, 0.0
        %v310 = vmul.f32 %v302, 0.1
        %v311 = vmul.f32 %v304, 0.1
        %v312 = vsel %vm308, %v302, %v310
        %v313 = vsel %vm309, %v304, %v311
        %314 = vrot.lane.b32.xlu0 %v312, 17
        %v315 = vpop.permute.xlu0 %314
        %316 = vrot.lane.b32.xlu0 %v313, 17
        %v317 = vpop.permute.xlu0 %316
        %v318 = vlaneseq
        %v319 = vand.u32 %v318, 127
        %vm320 = vcmp.lt.s32.totalorder %v319, 17
        %v321 = vsel %vm320, %v315, %v317
        %v322 = vsel %vm320, %v317, %v315
        %v323 = vlaneseq
        %v324 = vshrl.u32 %v323, 7
        %v325 = vsub.s32 0, %v324
        %v326 = vrot.slane %v247, %v325
        %v327 = vlaneseq
        %v328 = vshrl.u32 %v327, 7
        %v329 = vsub.s32 0, %v328
        %v330 = vrot.slane %v248, %v329
        %v331 = vmul.f32 %v322, %v326
        %v332 = vmul.f32 %v321, %v330
        %333 = vrot.lane.b32.xlu0 %v312, 16
        %v334 = vpop.permute.xlu0 %333
        %335 = vrot.lane.b32.xlu0 %v313, 16
        %v336 = vpop.permute.xlu0 %335
        %vm337 = vcmp.lt.s32.totalorder %v319, 16
        %v338 = vsel %vm337, %v334, %v336
        %v339 = vsel %vm337, %v336, %v334
        %v340 = vlaneseq
        %v341 = vshrl.u32 %v340, 7
        %v342 = vsub.s32 1, %v341
        %v343 = vrot.slane %v247, %v342
        %v344 = vlaneseq
        %v345 = vshrl.u32 %v344, 7
        %v346 = vsub.s32 1, %v345
        %v347 = vrot.slane %v248, %v346
        %v348 = vmul.f32 %v339, %v343
        %v349 = vmul.f32 %v338, %v347
        %350 = vrot.lane.b32.xlu0 %v312, 15
        %v351 = vpop.permute.xlu0 %350
        %352 = vrot.lane.b32.xlu0 %v313, 15
        %v353 = vpop.permute.xlu0 %352
        %vm354 = vcmp.lt.s32.totalorder %v319, 15
        %v355 = vsel %vm354, %v351, %v353
        %v356 = vsel %vm354, %v353, %v351
        %v357 = vlaneseq
        %v358 = vshrl.u32 %v357, 7
        %v359 = vsub.s32 2, %v358
        %v360 = vrot.slane %v247, %v359
        %v361 = vlaneseq
        %v362 = vshrl.u32 %v361, 7
        %v363 = vsub.s32 2, %v362
        %v364 = vrot.slane %v248, %v363
        %v365 = vmul.f32 %v356, %v360
        %v366 = vmul.f32 %v355, %v364
        %367 = vrot.lane.b32.xlu0 %v312, 1
        %v368 = vpop.permute.xlu0 %367
        %369 = vrot.lane.b32.xlu0 %v313, 1
        %v370 = vpop.permute.xlu0 %369
        %vm371 = vcmp.lt.s32.totalorder %v319, 1
        %v372 = vsel %vm371, %v368, %v370
        %v373 = vsel %vm371, %v370, %v368
        %v374 = vlaneseq
        %v375 = vshrl.u32 %v374, 7
        %v376 = vsub.s32 3, %v375
        %v377 = vrot.slane %v247, %v376
        %v378 = vlaneseq
        %v379 = vshrl.u32 %v378, 7
        %v380 = vsub.s32 3, %v379
        %v381 = vrot.slane %v248, %v380
        %v382 = vmul.f32 %v373, %v377
        %v383 = vmul.f32 %v372, %v381
        %384 = vrot.lane.b32.xlu0 %v312, 127
        %v385 = vpop.permute.xlu0 %384
        %386 = vrot.lane.b32.xlu0 %v313, 127
        %v387 = vpop.permute.xlu0 %386
        %vm388 = vcmp.lt.s32.totalorder %v319, 127
        %v389 = vsel %vm388, %v385, %v387
        %v390 = vsel %vm388, %v387, %v385
        %v391 = vlaneseq
        %v392 = vshrl.u32 %v391, 7
        %v393 = vsub.s32 4, %v392
        %v394 = vrot.slane %v247, %v393
        %v395 = vlaneseq
        %v396 = vshrl.u32 %v395, 7
        %v397 = vsub.s32 4, %v396
        %v398 = vrot.slane %v248, %v397
        %v399 = vmul.f32 %v389, %v394
        %v400 = vmul.f32 %v390, %v398
        %401 = vrot.lane.b32.xlu0 %v312, 113
        %v402 = vpop.permute.xlu0 %401
        %403 = vrot.lane.b32.xlu0 %v313, 113
        %v404 = vpop.permute.xlu0 %403
        %vm405 = vcmp.lt.s32.totalorder %v319, 113
        %v406 = vsel %vm405, %v402, %v404
        %v407 = vsel %vm405, %v404, %v402
        %v408 = vlaneseq
        %v409 = vshrl.u32 %v408, 7
        %v410 = vsub.s32 5, %v409
        %v411 = vrot.slane %v247, %v410
        %v412 = vlaneseq
        %v413 = vshrl.u32 %v412, 7
        %v414 = vsub.s32 5, %v413
        %v415 = vrot.slane %v248, %v414
        %v416 = vmul.f32 %v406, %v411
        %v417 = vmul.f32 %v407, %v415
        %418 = vrot.lane.b32.xlu0 %v312, 112
        %v419 = vpop.permute.xlu0 %418
        %420 = vrot.lane.b32.xlu0 %v313, 112
        %v421 = vpop.permute.xlu0 %420
        %vm422 = vcmp.lt.s32.totalorder %v319, 112
        %v423 = vsel %vm422, %v419, %v421
        %v424 = vsel %vm422, %v421, %v419
        %v425 = vlaneseq
        %v426 = vshrl.u32 %v425, 7
        %v427 = vsub.s32 6, %v426
        %v428 = vrot.slane %v247, %v427
        %v429 = vlaneseq
        %v430 = vshrl.u32 %v429, 7
        %v431 = vsub.s32 6, %v430
        %v432 = vrot.slane %v248, %v431
        %v433 = vmul.f32 %v423, %v428
        %v434 = vmul.f32 %v424, %v432
        %435 = vrot.lane.b32.xlu0 %v312, 111
        %v436 = vpop.permute.xlu0 %435
        %437 = vrot.lane.b32.xlu0 %v313, 111
        %v438 = vpop.permute.xlu0 %437
        %vm439 = vcmp.lt.s32.totalorder %v319, 111
        %v440 = vsel %vm439, %v436, %v438
        %v441 = vsel %vm439, %v438, %v436
        %v442 = vlaneseq
        %v443 = vshrl.u32 %v442, 7
        %v444 = vsub.s32 7, %v443
        %v445 = vrot.slane %v247, %v444
        %v446 = vlaneseq
        %v447 = vshrl.u32 %v446, 7
        %v448 = vsub.s32 7, %v447
        %v449 = vrot.slane %v248, %v448
        %v450 = vmul.f32 %v440, %v445
        %v451 = vmul.f32 %v441, %v449
        %v452 = vpack.c.bf16 %v348, %v331
        %v453 = vpack.c.bf16 %v349, %v332
        %v454 = vpack.c.bf16 %v382, %v365
        %v455 = vpack.c.bf16 %v383, %v366
        %v456 = vpack.c.bf16 %v399, %v312
        %v457 = vpack.c.bf16 %v400, %v313
        %v458 = vpack.c.bf16 %v433, %v416
        %v459 = vpack.c.bf16 %v434, %v417
        %v460 = vpack.c.bf16 %v450, %v450
        %v461 = vpack.c.bf16 %v451, %v451
        %463 = vset.pattern.permute.xlu0 0
        %464 = vperm.xlu0 %463, %v250
        %v465 = vpop.permute.xlu0 %464
        %468 = vset.pattern.permute.xlu0 0
        %469 = vperm.xlu0 %468, %v251
        %v470 = vpop.permute.xlu0 %469
        %v474 = vunpack.c.l.b16 %v245
        %v475 = vunpack.c.l.b16 %v246
        %v476 = vpack.c.b16 %v475, %v474
        %vm477 = vcmask 588800
        %v479 = vsel %vm477, %v476, 0
        %vm481 = vcmask 1043456
        %v483 = vsel %vm481, %v460, 0
        %v486 = vsel %vm481, %v461, 0
        %488 = vmatprep.subr.bf16.mxu0 %v453
        %489 = vmatpush1.bf16.msra.mxu0 %v452
        %490 = vmatprep.subr.bf16.mxu0 %v455
        %491 = vmatpush1.bf16.msra.mxu0 %v454
        %492 = vmatprep.subr.bf16.mxu0 %v457
        %493 = vmatpush1.bf16.msra.mxu0 %v456
        %494 = vmatprep.subr.bf16.mxu0 %v459
        %495 = vmatpush1.bf16.msra.mxu0 %v458
        %496 = vmatprep.subr.bf16.mxu0 %v486
        %497 = vmatpush1.bf16.msra.mxu0 %v483
        %498 = vmatprep.subr.bf16.mxu0 0
        %499 = vmatpush1.bf16.msra.mxu0 0
        %500 = vmatprep.subr.bf16.mxu0 0
        %501 = vmatpush1.bf16.msra.mxu0 0
        %502 = vmatprep.subr.bf16.mxu0 0
        %503 = vmatpush1.bf16.msra.mxu0 0
        %504 = vmatprep.subr.bf16.mxu0 0
        %505 = vmatpush1.bf16.msra.mxu0 0
        %506 = vmatprep.subr.bf16.mxu0 0
        %507 = vmatpush1.bf16.msra.mxu0 0
        %508 = vmatprep.subr.bf16.mxu0 0
        %509 = vmatpush1.bf16.msra.mxu0 0
        %510 = vmatprep.subr.bf16.mxu0 0
        %511 = vmatpush1.bf16.msra.mxu0 0
        %512 = vmatprep.subr.bf16.mxu0 0
        %513 = vmatpush1.bf16.msra.mxu0 0
        %514 = vmatprep.subr.bf16.mxu0 0
        %515 = vmatpush1.bf16.msra.mxu0 0
        %516 = vmatprep.subr.bf16.mxu0 0
        %517 = vmatpush1.bf16.msra.mxu0 0
        %518 = vmatprep.subr.bf16.mxu0 0
        %519 = vmatpush1.bf16.msra.mxu0 0
        %520 = vmatprep.mubr.bf16.mxu0 0
        %521 = vmatmul.mubr.bf16.gmra.mrb[0].mxu0 %v479
        %v522 = vpop.f32.mrb[0].mxu0
        %v523 = vadd.f32 %v465, %v522
        %v524 = vpop.f32.mrb[0].mxu0
        %v525 = vadd.f32 %v465, %v524
        %v526 = vpop.f32.mrb[0].mxu0
        %v527 = vadd.f32 %v470, %v526
        %v528 = vpop.f32.mrb[0].mxu0
        %v529 = vadd.f32 %v470, %v528
        %530 = vdwg.mxu0
        %vm531 = vcmp.gt.f32.partialorder %v523, 0.0
        %vm532 = vcmp.gt.f32.partialorder %v525, 0.0
        %vm533 = vcmp.gt.f32.partialorder %v527, 0.0
        %vm534 = vcmp.gt.f32.partialorder %v529, 0.0
        %v535 = vmul.f32 %v523, 0.1
        %v536 = vmul.f32 %v525, 0.1
        %v537 = vmul.f32 %v527, 0.1
        %v538 = vmul.f32 %v529, 0.1
        %v539 = vsel %vm531, %v523, %v535
        %v540 = vsel %vm532, %v525, %v536
        %v541 = vsel %vm533, %v527, %v537
        %v542 = vsel %vm534, %v529, %v538
        %v543 = vadd.f32 %v252, %v539
        %v544 = vadd.f32 %v253, %v540
        %v545 = vadd.f32 %v254, %v541
        %v546 = vadd.f32 %v255, %v542
        %547 = vst [vmem:[%s242] sm:$0xff] %v543
        %548 = vst [vmem:[%s242 + $0x8] sm:$0xff] %v544
        %549 = vst [vmem:[%s242 + $0x10] sm:$0xff] %v545
        %550 = vst [vmem:[%s242 + $0x18] sm:$0xff] %v546
        %s551 = sand.u32 %s140, 1
        %s552 = scalar_lea.sflag [#allocation4], %s551
        %s553 = sand.u32 %s140, 1
        %s554 = smul.addr %s553, 32
        %s555 = scalar_lea.vmem [#allocation5], %s554
        // Predicated region
        $region45: #{tpu_custom_call.1} parent=39 // pred_check
          %p556 = pneg %p150
        $region46: #{tpu_custom_call.1} parent=39 // pred_check_branch
          %558 = sbr.rel (%p556) target = $region48
        $region47: #{tpu_custom_call.1} parent=39 // pred_region
          %s560 = ssub.s32 512, 512
          %561 = vsyncadd %s552, %s560
          %s562 = smul.addr %s22, 4
          %s563 = smul.addr %s562, 128
          %s564 = scalar_lea.hbm %s5, %s563
          %s565 = sshll.u32 %s555, 4
          %s566 = int_to_ptr.vmem [resolvable:$true] %s565
          %571 = dma.vmem_to_hbm [thread:$0]  %s566, 512, %s564, %s552, 256, 256, 16
        $region48: #{tpu_custom_call.1} parent=39 // pred_fallthru
          _
      $region40: #{tpu_custom_call.1} parent=5 // pred_fallthru
        _
      %p572 = scmp.le.s32.totalorder 2, %s17
      // Predicated region
      $region49: #{tpu_custom_call.1} parent=5 // pred_check
        %p573 = pneg %p572
      $region50: #{tpu_custom_call.1} parent=5 // pred_check_branch
        %575 = sbr.rel (%p573) target = $region52
      $region51: #{tpu_custom_call.1} parent=5 // pred_region
        %s576 = ssub.s32 %s17, 2
        // Predicated region
        $region53: #{tpu_custom_call.1} parent=51 // pred_check
          %p577 = pneg %p156
        $region54: #{tpu_custom_call.1} parent=51 // pred_check_branch
          %579 = sbr.rel (%p577) target = $region56
        $region55: #{tpu_custom_call.1} parent=51 // pred_region
          %s580 = sand.u32 %s141, 1
          %s581 = scalar_lea.sflag [#allocation4], %s580
          %s582 = sand.u32 %s141, 1
          %s583 = smul.addr %s582, 32
          %s584 = scalar_lea.vmem [#allocation5], %s583
          %585 = dma.done %s581, 512
        $region56: #{tpu_custom_call.1} parent=51 // pred_fallthru
          _
      $region52: #{tpu_custom_call.1} parent=5 // pred_fallthru
        _
    $region6: #{tpu_custom_call.1} parent=1 // loop_footer
      %s21 = sadd.s32 1, %s17
    $region7: #{tpu_custom_call.1} parent=1 // loop_footer_branch
      %16 = sbr.rel target = $region3
    $region8: #{tpu_custom_call.1} parent=1 // loop_exit
      _
    %586 = vsyncpa [#allocation3], 1
    %s587 = scalar_lea.sflag [#allocation3], 1
    %588 = vsyncpa %s587, 1
    %589 = vsyncpa [#allocation4], 1
    %s590 = scalar_lea.sflag [#allocation4], 1
    %591 = vsyncpa %s590, 1

</llo_original>
